<compile_context>
chip_gen: v7x
topology: tpu7x:2x2x1
jax: 0.10.0
libtpu: 0.0.40
codegen_flags: <defaults>
</compile_context>

<pallas_src>
import numpy as np
import jax
import jax.numpy as jnp
from jax.experimental import pallas as pl
from jax.experimental.pallas import tpu as pltpu


def mgru_ode_cell_kernel(ht_ref, whz_ref, whn_ref, dht_ref):
    """One MGRUODECell.forward evaluation on a transposed [H, TB] batch tile.

    zT  = sigmoid(Whz @ hT)        ( == (h @ Whz^T)^T   = lin_hz(h)^T )
    nT  = tanh  (Whn @ (zT * hT))  ( == ((z*h) @ Whn^T)^T = lin_hn(z*h)^T )
    dhT = (1 - zT) * (nT - hT)
    """
    ht = ht_ref[...]                                                   # [H, TB] f32
    z = jax.nn.sigmoid(
        jnp.dot(whz_ref[...], ht, preferred_element_type=jnp.float32))
    n = jnp.tanh(
        jnp.dot(whn_ref[...], z * ht, preferred_element_type=jnp.float32))
    dht_ref[...] = ((1.0 - z) * (n - ht)).astype(dht_ref.dtype)


def mgru_ode_cell_forward_t(t, ht, whz, whn, *, max_lane_tile=2048):
    """Transposed-layout forward: ht is [H, B] (batch on lanes); returns dh^T [H, B].

    This is the layout an ODE solver should carry h in between steps so no
    per-step transposes are ever paid.  whz / whn are the torch Linear weights
    in their native [H_out, H_in] layout (no transpose required).
    """
    del t  # unused by the module's forward (kept for ODE-cell signature parity)
    H, B = ht.shape
    assert whz.shape == (H, H) and whn.shape == (H, H)

    # Batch (lane) tile: one grid step if the whole batch fits the budget, else
    # the largest multiple-of-128 tile <= max_lane_tile that divides B.
    if B <= max_lane_tile:
        tb = B
    else:
        tb = max_lane_tile - (max_lane_tile % 128)
        while tb > 0 and B % tb != 0:
            tb -= 128
        assert tb > 0, "batch must be a multiple of 128 when it exceeds max_lane_tile"
    grid = (B // tb,)

    tile_spec = pl.BlockSpec((H, tb), lambda i: (0, i))                # lane-dense tiles
    # Weight blocks are grid-invariant (constant index_map).  With the common
    # single-step grid they are not pipelined at all; for multi-tile grids the
    # extra double-buffer is only H*H*4 bytes each, so the pl.Buffered(1)
    # single-buffering hint is intentionally omitted (negligible at H=32).
    const_spec = pl.BlockSpec((H, H), lambda i: (0, 0))

    # Explicit VMEM budget: double-buffered in/out tiles + both (double-buffered)
    # weights + slack, so the tile choice stays valid on v7x's smaller VMEM.
    itemsize = jnp.dtype(ht.dtype).itemsize
    tile_bytes = H * tb * itemsize
    weight_bytes = 2 * H * H * 4
    vmem_limit = int(2 * (2 * tile_bytes) + 2 * weight_bytes + (4 << 20))

    # Only ask for megacore splitting when there are >= 2 substantial tiles.
    dim_sem = ("parallel",) if grid[0] >= 2 else ("arbitrary",)

    return pl.pallas_call(
        mgru_ode_cell_kernel,
        out_shape=jax.ShapeDtypeStruct((H, B), ht.dtype),
        grid_spec=pltpu.PrefetchScalarGridSpec(
            num_scalar_prefetch=0,
            grid=grid,
            in_specs=[tile_spec, const_spec, const_spec],
            out_specs=tile_spec,
        ),
        compiler_params=pltpu.CompilerParams(
            dimension_semantics=dim_sem,
            vmem_limit_bytes=vmem_limit,
        ),
    )(ht, whz, whn)


def mgru_ode_cell_forward(t, h, whz, whn, *, max_lane_tile=2048):
    """API-parity wrapper matching MGRUODECell.forward(t, h) -> dh, with h/dh [B, H].

    The h.T / dh.T here are pure layout plumbing to present a lane-dense
    (batch-on-lanes) slab to the kernel; a fused solver loop keeps h in [H, B]
    form and calls mgru_ode_cell_forward_t directly, never paying them.
    """
    dht = mgru_ode_cell_forward_t(t, h.T, whz, whn, max_lane_tile=max_lane_tile)
    return dht.T


def mgru_ode_cell_ref(t, h, whz, whn):
    """Pure-JAX reference mirroring the torch forward."""
    del t
    x = jnp.zeros_like(h)
    z = jax.nn.sigmoid(x + h @ whz.T)
    n = jnp.tanh(x + (z * h) @ whn.T)
    return (1.0 - z) * (n - h)


def init_params(key, hidden_size):
    """Matches module init: xavier_uniform_ on both Linear weights, bias=False."""
    H = hidden_size
    kz, kn = jax.random.split(key, 2)
    lim = float(np.sqrt(6.0 / (H + H)))
    whz = jax.random.uniform(kz, (H, H), jnp.float32, -lim, lim)
    whn = jax.random.uniform(kn, (H, H), jnp.float32, -lim, lim)
    return whz, whn


if __name__ == "__main__":
    H = 32            # hidden_size (module-scale toy size)
    B = 256           # batch: multiple of 128 so the lane (batch) axis is dense

    key = jax.random.PRNGKey(0)
    kp, kh = jax.random.split(key, 2)
    whz, whn = init_params(kp, H)
    h = jax.random.normal(kh, (B, H), jnp.float32)
    t = jnp.float32(0.0)

    dh = mgru_ode_cell_forward(t, h, whz, whn)
    jax.block_until_ready(dh)

    dh_ref = mgru_ode_cell_ref(t, h, whz, whn)
    np.testing.assert_allclose(np.asarray(dh), np.asarray(dh_ref), rtol=1e-5, atol=1e-5)
    assert np.all(np.isfinite(np.asarray(dh)))
    print("KERNEL_OK")
</pallas_src>

<mosaic_0001>
module attributes {stable_mosaic.version = 11 : i64} {
  func.func @mgru_ode_cell_kernel(%arg0: i32, %arg1: memref<32x256xf32, #tpu.memory_space<vmem>>, %arg2: memref<32x32xf32, #tpu.memory_space<vmem>>, %arg3: memref<32x32xf32, #tpu.memory_space<vmem>>, %arg4: memref<32x256xf32, #tpu.memory_space<vmem>>) attributes {dimension_semantics = [#tpu.dimension_semantics<arbitrary>], iteration_bounds = array<i64: 1>, scalar_prefetch = 0 : i64, scratch_operands = 0 : i64, tpu.core_type = #tpu.core_type<tc>, window_params = [{transform_indices = @transform_0, window_bounds = array<i64: 32, 256>}, {pipeline_mode = #tpu.pipeline_mode<synchronous>, transform_indices = @transform_1, window_bounds = array<i64: 32, 32>}, {pipeline_mode = #tpu.pipeline_mode<synchronous>, transform_indices = @transform_2, window_bounds = array<i64: 32, 32>}, {transform_indices = @transform_3, window_bounds = array<i64: 32, 256>}]} {
    %c0 = arith.constant 0 : index
    %c0_0 = arith.constant 0 : index
    %0 = vector.load %arg1[%c0, %c0_0] : memref<32x256xf32, #tpu.memory_space<vmem>>, vector<32x256xf32>
    %c0_1 = arith.constant 0 : index
    %c0_2 = arith.constant 0 : index
    %1 = vector.load %arg2[%c0_1, %c0_2] : memref<32x32xf32, #tpu.memory_space<vmem>>, vector<32x32xf32>
    %cst = arith.constant dense<0.000000e+00> : vector<32x256xf32>
    %2 = tpu.matmul %1, %0, %cst {dimension_numbers = #tpu.dot_dimension_numbers<[1], [0], [0], [1], [0, 0, 1, 1], [], []>} : vector<32x32xf32>, vector<32x256xf32>, vector<32x256xf32> -> vector<32x256xf32>
    %3 = arith.negf %2 : vector<32x256xf32>
    %4 = math.exp %3 : vector<32x256xf32>
    %cst_3 = arith.constant 1.000000e+00 : f32
    %5 = vector.broadcast %cst_3 : f32 to vector<32x256xf32>
    %6 = arith.addf %5, %4 : vector<32x256xf32>
    %7 = arith.divf %5, %6 : vector<32x256xf32>
    %c0_4 = arith.constant 0 : index
    %c0_5 = arith.constant 0 : index
    %8 = vector.load %arg3[%c0_4, %c0_5] : memref<32x32xf32, #tpu.memory_space<vmem>>, vector<32x32xf32>
    %9 = arith.mulf %7, %0 : vector<32x256xf32>
    %cst_6 = arith.constant dense<0.000000e+00> : vector<32x256xf32>
    %10 = tpu.matmul %8, %9, %cst_6 {dimension_numbers = #tpu.dot_dimension_numbers<[1], [0], [0], [1], [0, 0, 1, 1], [], []>} : vector<32x32xf32>, vector<32x256xf32>, vector<32x256xf32> -> vector<32x256xf32>
    %11 = math.tanh %10 : vector<32x256xf32>
    %cst_7 = arith.constant 1.000000e+00 : f32
    %12 = vector.broadcast %cst_7 : f32 to vector<32x256xf32>
    %13 = arith.subf %12, %7 : vector<32x256xf32>
    %14 = arith.subf %11, %0 : vector<32x256xf32>
    %15 = arith.mulf %13, %14 : vector<32x256xf32>
    %c0_8 = arith.constant 0 : index
    %c0_9 = arith.constant 0 : index
    %16 = vector.load %arg4[%c0_8, %c0_9] : memref<32x256xf32, #tpu.memory_space<vmem>>, vector<32x256xf32>
    tpu.vector_store %arg4[%c0_8, %c0_9], %15 {strides = array<i32>} : memref<32x256xf32, #tpu.memory_space<vmem>>, vector<32x256xf32>,
    return
  }
  func.func @transform_0(%arg0: i32) -> (i32, i32) {
    %c0_i32 = arith.constant 0 : i32
    %c0_i32_0 = arith.constant 0 : i32
    return %c0_i32, %arg0 : i32, i32
  }
  func.func @transform_1(%arg0: i32) -> (i32, i32) {
    %c0_i32 = arith.constant 0 : i32
    %c0_i32_0 = arith.constant 0 : i32
    %c0_i32_1 = arith.constant 0 : i32
    return %c0_i32, %c0_i32_0 : i32, i32
  }
  func.func @transform_2(%arg0: i32) -> (i32, i32) {
    %c0_i32 = arith.constant 0 : i32
    %c0_i32_0 = arith.constant 0 : i32
    %c0_i32_1 = arith.constant 0 : i32
    return %c0_i32, %c0_i32_0 : i32, i32
  }
  func.func @transform_3(%arg0: i32) -> (i32, i32) {
    %c0_i32 = arith.constant 0 : i32
    %c0_i32_0 = arith.constant 0 : i32
    return %c0_i32, %arg0 : i32, i32
  }
}

</mosaic_0001>

<llo_original>
// kernel: tpu_custom_call.1
$region0: #{tpu_custom_call.1}
  #allocation0 [shape = 'u32[]', space=smem, size = 0x4, offset = 0x4, fixed_abs, tag = 'smem constant byte address 0x4 - core index']
  #allocation1 [shape = 'u32[144,128]{1,0:T(1,128)}', space=vmem, size = 0x12000, scoped, tag = 'internal scratch']
  %s0 = inlined_call_operand.hbm [shape: f32[32,256], index: 0, kind: input, shape index: {}]
  %s1 = inlined_call_operand.hbm [shape: f32[32,32], index: 1, kind: input, shape index: {}]
  %s2 = inlined_call_operand.hbm [shape: f32[32,32], index: 2, kind: input, shape index: {}]
  %s3 = inlined_call_operand.hbm [shape: f32[32,256], index: 3, kind: output, shape index: {}]
  %s4 = sld [smem:[#allocation0]]
  $region34: #{tpu_custom_call.1} parent=0
    _
  %s6 = ssub.s32 1, %s4
  %s7 = scalar_select 0, %s6, %s4
  $region1: #{tpu_custom_call.1} parent=0
    #allocation2 [shape = 'u8[32768]{0}', space=vmem, size = 0x8000, scoped, tag = 'input window, operand 0, single buffered']
    #allocation3 [shape = 's32[1]{0}', space=sflag, size = 0x4, scoped, tag = 'scoped memory for tpu_custom_call.1']
    #allocation4 [shape = 's32[1]{0}', space=sflag, size = 0x4, scoped, tag = 'scoped memory for tpu_custom_call.1']
    #allocation5 [shape = 'u8[16384]{0}', space=vmem, size = 0x4000, scoped, tag = 'input window, operand 1, single buffered']
    #allocation6 [shape = 's32[1]{0}', space=sflag, size = 0x4, scoped, tag = 'scoped memory for tpu_custom_call.1']
    #allocation7 [shape = 'u8[16384]{0}', space=vmem, size = 0x4000, scoped, tag = 'input window, operand 2, single buffered']
    #allocation8 [shape = 'u8[32768]{0}', space=vmem, size = 0x8000, scoped, tag = 'output window, operand 0, single buffered']
    %8 = vsyncpa [#allocation3], 0
    %9 = vsyncpa [#allocation6], 0
    %10 = vsyncpa [#allocation4], 0
    // Predicated region
    $region2: #{tpu_custom_call.1} parent=1 // pred_check
      _
    $region3: #{tpu_custom_call.1} parent=1 // pred_check_branch
      %12 = sbr.rel (0) target = $region5
    $region4: #{tpu_custom_call.1} parent=1 // pred_region
      %s14 = ssub.s32 1024, 1024
      %15 = vsyncadd [#allocation3], %s14
      %s16 = sshll.u32 [#allocation2], 4
      %s17 = int_to_ptr.vmem [resolvable:$true] %s16
      %22 = dma.hbm_to_vmem [thread:$0]  %s0, 1024, %s17, [#allocation3], 256, 256, 16
    $region5: #{tpu_custom_call.1} parent=1 // pred_fallthru
      _
    // Predicated region
    $region6: #{tpu_custom_call.1} parent=1 // pred_check
      _
    $region7: #{tpu_custom_call.1} parent=1 // pred_check_branch
      %24 = sbr.rel (0) target = $region9
    $region8: #{tpu_custom_call.1} parent=1 // pred_region
      %s26 = ssub.s32 512, 512
      %27 = vsyncadd [#allocation6], %s26
      %s28 = sshll.u32 [#allocation5], 4
      %s29 = int_to_ptr.vmem [resolvable:$true] %s28
      %34 = dma.hbm_to_vmem [thread:$0]  %s1, 512, %s29, [#allocation6], 128, 128, 8
    $region9: #{tpu_custom_call.1} parent=1 // pred_fallthru
      _
    // Predicated region
    $region10: #{tpu_custom_call.1} parent=1 // pred_check
      _
    $region11: #{tpu_custom_call.1} parent=1 // pred_check_branch
      %36 = sbr.rel (0) target = $region13
    $region12: #{tpu_custom_call.1} parent=1 // pred_region
      %s38 = ssub.s32 512, 512
      %39 = vsyncadd [#allocation6], %s38
      %s40 = sshll.u32 [#allocation7], 4
      %s41 = int_to_ptr.vmem [resolvable:$true] %s40
      %46 = dma.hbm_to_vmem [thread:$0]  %s2, 512, %s41, [#allocation6], 128, 128, 8
    $region13: #{tpu_custom_call.1} parent=1 // pred_fallthru
      _
    // Predicated region
    $region14: #{tpu_custom_call.1} parent=1 // pred_check
      _
    $region15: #{tpu_custom_call.1} parent=1 // pred_check_branch
      %48 = sbr.rel (0) target = $region17
    $region16: #{tpu_custom_call.1} parent=1 // pred_region
      %49 = dma.done [#allocation3], 1024
    $region17: #{tpu_custom_call.1} parent=1 // pred_fallthru
      _
    // Predicated region
    $region18: #{tpu_custom_call.1} parent=1 // pred_check
      _
    $region19: #{tpu_custom_call.1} parent=1 // pred_check_branch
      %51 = sbr.rel (0) target = $region21
    $region20: #{tpu_custom_call.1} parent=1 // pred_region
      %52 = dma.done [#allocation6], 512
    $region21: #{tpu_custom_call.1} parent=1 // pred_fallthru
      _
    // Predicated region
    $region22: #{tpu_custom_call.1} parent=1 // pred_check
      _
    $region23: #{tpu_custom_call.1} parent=1 // pred_check_branch
      %54 = sbr.rel (0) target = $region25
    $region24: #{tpu_custom_call.1} parent=1 // pred_region
      %55 = dma.done [#allocation6], 512
    $region25: #{tpu_custom_call.1} parent=1 // pred_fallthru
      _
    %v56 = vld [vmem:[#allocation2] sm:$0xff]
    %v57 = vld [vmem:[#allocation2 + $0x8] sm:$0xff]
    %v58 = vld [vmem:[#allocation2 + $0x10] sm:$0xff]
    %v59 = vld [vmem:[#allocation2 + $0x18] sm:$0xff]
    %v60 = vld [vmem:[#allocation2 + $0x20] sm:$0xff]
    %v61 = vld [vmem:[#allocation2 + $0x28] sm:$0xff]
    %v62 = vld [vmem:[#allocation2 + $0x30] sm:$0xff]
    %v63 = vld [vmem:[#allocation2 + $0x38] sm:$0xff]
    %v64 = vld [vmem:[#allocation5] sm:$0xff]
    %v65 = vld [vmem:[#allocation5 + $0x8] sm:$0xff]
    %v66 = vld [vmem:[#allocation5 + $0x10] sm:$0xff]
    %v67 = vld [vmem:[#allocation5 + $0x18] sm:$0xff]
    %vm68 = vcmask 261120
    %v70 = vsel %vm68, %v64, 0
    %v73 = vsel %vm68, %v65, 0
    %v76 = vsel %vm68, %v66, 0
    %v79 = vsel %vm68, %v67, 0
    %81 = vmatprep.subr.mxu0 %v57
    %82 = vmatpush1.msra.mxu0 %v56
    %83 = vmatprep.subr.mxu0 %v59
    %84 = vmatpush1.msra.mxu0 %v58
    %85 = vmatprep.subr.mxu0 %v61
    %86 = vmatpush1.msra.mxu0 %v60
    %87 = vmatprep.subr.mxu0 %v63
    %88 = vmatpush1.msra.mxu0 %v62
    %89 = vmatprep.subr.mxu0 0.0
    %90 = vmatpush1.msra.mxu0 0.0
    %91 = vmatprep.subr.mxu0 0.0
    %92 = vmatpush1.msra.mxu0 0.0
    %93 = vmatprep.subr.mxu0 0.0
    %94 = vmatpush1.msra.mxu0 0.0
    %95 = vmatprep.subr.mxu0 0.0
    %96 = vmatpush1.msra.mxu0 0.0
    %97 = vmatprep.subr.mxu0 0.0
    %98 = vmatpush1.msra.mxu0 0.0
    %99 = vmatprep.subr.mxu0 0.0
    %100 = vmatpush1.msra.mxu0 0.0
    %101 = vmatprep.subr.mxu0 0.0
    %102 = vmatpush1.msra.mxu0 0.0
    %103 = vmatprep.subr.mxu0 0.0
    %104 = vmatpush1.msra.mxu0 0.0
    %105 = vmatprep.subr.mxu0 0.0
    %106 = vmatpush1.msra.mxu0 0.0
    %107 = vmatprep.subr.mxu0 0.0
    %108 = vmatpush1.msra.mxu0 0.0
    %109 = vmatprep.subr.mxu0 0.0
    %110 = vmatpush1.msra.mxu0 0.0
    %111 = vmatprep.subr.mxu0 0.0
    %112 = vmatpush1.msra.mxu0 0.0
    %113 = vmatprep.subr.mxu0 0.0
    %114 = vmatpush1.msra.mxu0 0.0
    %115 = vmatprep.subr.mxu0 0.0
    %116 = vmatpush1.msra.mxu0 0.0
    %117 = vmatprep.subr.mxu0 0.0
    %118 = vmatpush1.msra.mxu0 0.0
    %119 = vmatprep.subr.mxu0 0.0
    %120 = vmatpush1.msra.mxu0 0.0
    %121 = vmatprep.subr.mxu0 0.0
    %122 = vmatpush1.msra.mxu0 0.0
    %123 = vmatprep.subr.mxu0 0.0
    %124 = vmatpush1.msra.mxu0 0.0
    %125 = vmatprep.subr.mxu0 0.0
    %126 = vmatpush1.msra.mxu0 0.0
    %127 = vmatprep.subr.mxu0 0.0
    %128 = vmatpush1.msra.mxu0 0.0
    %129 = vmatprep.subr.mxu0 0.0
    %130 = vmatpush1.msra.mxu0 0.0
    %131 = vmatprep.subr.mxu0 0.0
    %132 = vmatpush1.msra.mxu0 0.0
    %133 = vmatprep.subr.mxu0 0.0
    %134 = vmatpush1.msra.mxu0 0.0
    %135 = vmatprep.subr.mxu0 0.0
    %136 = vmatpush1.msra.mxu0 0.0
    %137 = vmatprep.subr.mxu0 0.0
    %138 = vmatpush1.msra.mxu0 0.0
    %139 = vmatprep.subr.mxu0 0.0
    %140 = vmatpush1.msra.mxu0 0.0
    %141 = vmatprep.subr.mxu0 0.0
    %142 = vmatpush1.msra.mxu0 0.0
    %143 = vmatprep.subr.mxu0 0.0
    %144 = vmatpush1.msra.mxu0 0.0
    %145 = vmatprep.mubr.f32.mxu0 0.0
    %146 = vmatmul.mubr.f32.gmra.mrb[0].mxu0 %v70
    %v147 = vpop.f32.mrb[0].mxu0
    %v148 = vadd.f32 0.0, %v147
    %v149 = vpop.f32.mrb[0].mxu0
    %v150 = vadd.f32 0.0, %v149
    %151 = vmatprep.mubr.f32.mxu0 0.0
    %152 = vmatmul.mubr.f32.gmra.mrb[0].mxu0 %v73
    %v153 = vpop.f32.mrb[0].mxu0
    %v154 = vadd.f32 0.0, %v153
    %v155 = vpop.f32.mrb[0].mxu0
    %v156 = vadd.f32 0.0, %v155
    %157 = vmatprep.mubr.f32.mxu0 0.0
    %158 = vmatmul.mubr.f32.gmra.mrb[0].mxu0 %v76
    %v159 = vpop.f32.mrb[0].mxu0
    %v160 = vadd.f32 0.0, %v159
    %v161 = vpop.f32.mrb[0].mxu0
    %v162 = vadd.f32 0.0, %v161
    %163 = vmatprep.mubr.f32.mxu0 0.0
    %164 = vmatmul.mubr.f32.gmra.mrb[0].mxu0 %v79
    %v165 = vpop.f32.mrb[0].mxu0
    %v166 = vadd.f32 0.0, %v165
    %v167 = vpop.f32.mrb[0].mxu0
    %v168 = vadd.f32 0.0, %v167
    %169 = vdwg.mxu0
    %v170 = vxor.u32 %v148, 2147483648
    %v171 = vxor.u32 %v150, 2147483648
    %v172 = vxor.u32 %v154, 2147483648
    %v173 = vxor.u32 %v156, 2147483648
    %v174 = vxor.u32 %v160, 2147483648
    %v175 = vxor.u32 %v162, 2147483648
    %v176 = vxor.u32 %v166, 2147483648
    %v177 = vxor.u32 %v168, 2147483648
    %v178 = vmul.f32 %v170, 1.442695
    %v179 = vpow.pop %v178
    %v180 = vmul.f32 %v171, 1.442695
    %v181 = vpow.pop %v180
    %v182 = vmul.f32 %v172, 1.442695
    %v183 = vpow.pop %v182
    %v184 = vmul.f32 %v173, 1.442695
    %v185 = vpow.pop %v184
    %v186 = vmul.f32 %v174, 1.442695
    %v187 = vpow.pop %v186
    %v188 = vmul.f32 %v175, 1.442695
    %v189 = vpow.pop %v188
    %v190 = vmul.f32 %v176, 1.442695
    %v191 = vpow.pop %v190
    %v192 = vmul.f32 %v177, 1.442695
    %v193 = vpow.pop %v192
    %v194 = vadd.f32 %v179, 1.0
    %v195 = vadd.f32 %v181, 1.0
    %v196 = vadd.f32 %v183, 1.0
    %v197 = vadd.f32 %v185, 1.0
    %v198 = vadd.f32 %v187, 1.0
    %v199 = vadd.f32 %v189, 1.0
    %v200 = vadd.f32 %v191, 1.0
    %v201 = vadd.f32 %v193, 1.0
    %v202 = vrcp.pop %v194
    %v203 = vmul.f32 1.0, %v202
    %v204 = vrcp.pop %v195
    %v205 = vmul.f32 1.0, %v204
    %v206 = vrcp.pop %v196
    %v207 = vmul.f32 1.0, %v206
    %v208 = vrcp.pop %v197
    %v209 = vmul.f32 1.0, %v208
    %v210 = vrcp.pop %v198
    %v211 = vmul.f32 1.0, %v210
    %v212 = vrcp.pop %v199
    %v213 = vmul.f32 1.0, %v212
    %v214 = vrcp.pop %v200
    %v215 = vmul.f32 1.0, %v214
    %v216 = vrcp.pop %v201
    %v217 = vmul.f32 1.0, %v216
    %v218 = vld [vmem:[#allocation7] sm:$0xff]
    %v219 = vld [vmem:[#allocation7 + $0x8] sm:$0xff]
    %v220 = vld [vmem:[#allocation7 + $0x10] sm:$0xff]
    %v221 = vld [vmem:[#allocation7 + $0x18] sm:$0xff]
    %v222 = vmul.f32 %v203, %v56
    %v223 = vmul.f32 %v205, %v57
    %v224 = vmul.f32 %v207, %v58
    %v225 = vmul.f32 %v209, %v59
    %v226 = vmul.f32 %v211, %v60
    %v227 = vmul.f32 %v213, %v61
    %v228 = vmul.f32 %v215, %v62
    %v229 = vmul.f32 %v217, %v63
    %v231 = vsel %vm68, %v218, 0
    %v234 = vsel %vm68, %v219, 0
    %v237 = vsel %vm68, %v220, 0
    %v240 = vsel %vm68, %v221, 0
    %242 = vmatprep.subr.mxu0 %v223
    %243 = vmatpush1.msra.mxu0 %v222
    %244 = vmatprep.subr.mxu0 %v225
    %245 = vmatpush1.msra.mxu0 %v224
    %246 = vmatprep.subr.mxu0 %v227
    %247 = vmatpush1.msra.mxu0 %v226
    %248 = vmatprep.subr.mxu0 %v229
    %249 = vmatpush1.msra.mxu0 %v228
    %250 = vmatprep.subr.mxu0 0.0
    %251 = vmatpush1.msra.mxu0 0.0
    %252 = vmatprep.subr.mxu0 0.0
    %253 = vmatpush1.msra.mxu0 0.0
    %254 = vmatprep.subr.mxu0 0.0
    %255 = vmatpush1.msra.mxu0 0.0
    %256 = vmatprep.subr.mxu0 0.0
    %257 = vmatpush1.msra.mxu0 0.0
    %258 = vmatprep.subr.mxu0 0.0
    %259 = vmatpush1.msra.mxu0 0.0
    %260 = vmatprep.subr.mxu0 0.0
    %261 = vmatpush1.msra.mxu0 0.0
    %262 = vmatprep.subr.mxu0 0.0
    %263 = vmatpush1.msra.mxu0 0.0
    %264 = vmatprep.subr.mxu0 0.0
    %265 = vmatpush1.msra.mxu0 0.0
    %266 = vmatprep.subr.mxu0 0.0
    %267 = vmatpush1.msra.mxu0 0.0
    %268 = vmatprep.subr.mxu0 0.0
    %269 = vmatpush1.msra.mxu0 0.0
    %270 = vmatprep.subr.mxu0 0.0
    %271 = vmatpush1.msra.mxu0 0.0
    %272 = vmatprep.subr.mxu0 0.0
    %273 = vmatpush1.msra.mxu0 0.0
    %274 = vmatprep.subr.mxu0 0.0
    %275 = vmatpush1.msra.mxu0 0.0
    %276 = vmatprep.subr.mxu0 0.0
    %277 = vmatpush1.msra.mxu0 0.0
    %278 = vmatprep.subr.mxu0 0.0
    %279 = vmatpush1.msra.mxu0 0.0
    %280 = vmatprep.subr.mxu0 0.0
    %281 = vmatpush1.msra.mxu0 0.0
    %282 = vmatprep.subr.mxu0 0.0
    %283 = vmatpush1.msra.mxu0 0.0
    %284 = vmatprep.subr.mxu0 0.0
    %285 = vmatpush1.msra.mxu0 0.0
    %286 = vmatprep.subr.mxu0 0.0
    %287 = vmatpush1.msra.mxu0 0.0
    %288 = vmatprep.subr.mxu0 0.0
    %289 = vmatpush1.msra.mxu0 0.0
    %290 = vmatprep.subr.mxu0 0.0
    %291 = vmatpush1.msra.mxu0 0.0
    %292 = vmatprep.subr.mxu0 0.0
    %293 = vmatpush1.msra.mxu0 0.0
    %294 = vmatprep.subr.mxu0 0.0
    %295 = vmatpush1.msra.mxu0 0.0
    %296 = vmatprep.subr.mxu0 0.0
    %297 = vmatpush1.msra.mxu0 0.0
    %298 = vmatprep.subr.mxu0 0.0
    %299 = vmatpush1.msra.mxu0 0.0
    %300 = vmatprep.subr.mxu0 0.0
    %301 = vmatpush1.msra.mxu0 0.0
    %302 = vmatprep.subr.mxu0 0.0
    %303 = vmatpush1.msra.mxu0 0.0
    %304 = vmatprep.subr.mxu0 0.0
    %305 = vmatpush1.msra.mxu0 0.0
    %306 = vmatprep.mubr.f32.mxu0 0.0
    %307 = vmatmul.mubr.f32.gmra.mrb[0].mxu0 %v231
    %v308 = vpop.f32.mrb[0].mxu0
    %v309 = vadd.f32 0.0, %v308
    %v310 = vpop.f32.mrb[0].mxu0
    %v311 = vadd.f32 0.0, %v310
    %312 = vmatprep.mubr.f32.mxu0 0.0
    %313 = vmatmul.mubr.f32.gmra.mrb[0].mxu0 %v234
    %v314 = vpop.f32.mrb[0].mxu0
    %v315 = vadd.f32 0.0, %v314
    %v316 = vpop.f32.mrb[0].mxu0
    %v317 = vadd.f32 0.0, %v316
    %318 = vmatprep.mubr.f32.mxu0 0.0
    %319 = vmatmul.mubr.f32.gmra.mrb[0].mxu0 %v237
    %v320 = vpop.f32.mrb[0].mxu0
    %v321 = vadd.f32 0.0, %v320
    %v322 = vpop.f32.mrb[0].mxu0
    %v323 = vadd.f32 0.0, %v322
    %324 = vmatprep.mubr.f32.mxu0 0.0
    %325 = vmatmul.mubr.f32.gmra.mrb[0].mxu0 %v240
    %v326 = vpop.f32.mrb[0].mxu0
    %v327 = vadd.f32 0.0, %v326
    %v328 = vpop.f32.mrb[0].mxu0
    %v329 = vadd.f32 0.0, %v328
    %330 = vdwg.mxu0
    %v331 = vtanh.pop %v309
    %v332 = vtanh.pop %v311
    %v333 = vtanh.pop %v315
    %v334 = vtanh.pop %v317
    %v335 = vtanh.pop %v321
    %v336 = vtanh.pop %v323
    %v337 = vtanh.pop %v327
    %v338 = vtanh.pop %v329
    %v339 = vsub.f32 1.0, %v203
    %v340 = vsub.f32 1.0, %v205
    %v341 = vsub.f32 1.0, %v207
    %v342 = vsub.f32 1.0, %v209
    %v343 = vsub.f32 1.0, %v211
    %v344 = vsub.f32 1.0, %v213
    %v345 = vsub.f32 1.0, %v215
    %v346 = vsub.f32 1.0, %v217
    %v347 = vsub.f32 %v331, %v56
    %v348 = vsub.f32 %v332, %v57
    %v349 = vsub.f32 %v333, %v58
    %v350 = vsub.f32 %v334, %v59
    %v351 = vsub.f32 %v335, %v60
    %v352 = vsub.f32 %v336, %v61
    %v353 = vsub.f32 %v337, %v62
    %v354 = vsub.f32 %v338, %v63
    %v355 = vmul.f32 %v339, %v347
    %v356 = vmul.f32 %v340, %v348
    %v357 = vmul.f32 %v341, %v349
    %v358 = vmul.f32 %v342, %v350
    %v359 = vmul.f32 %v343, %v351
    %v360 = vmul.f32 %v344, %v352
    %v361 = vmul.f32 %v345, %v353
    %v362 = vmul.f32 %v346, %v354
    %363 = vst [vmem:[#allocation8] sm:$0xff] %v355
    %364 = vst [vmem:[#allocation8 + $0x8] sm:$0xff] %v356
    %365 = vst [vmem:[#allocation8 + $0x10] sm:$0xff] %v357
    %366 = vst [vmem:[#allocation8 + $0x18] sm:$0xff] %v358
    %367 = vst [vmem:[#allocation8 + $0x20] sm:$0xff] %v359
    %368 = vst [vmem:[#allocation8 + $0x28] sm:$0xff] %v360
    %369 = vst [vmem:[#allocation8 + $0x30] sm:$0xff] %v361
    %370 = vst [vmem:[#allocation8 + $0x38] sm:$0xff] %v362
    // Predicated region
    $region26: #{tpu_custom_call.1} parent=1 // pred_check
      _
    $region27: #{tpu_custom_call.1} parent=1 // pred_check_branch
      %372 = sbr.rel (0) target = $region29
    $region28: #{tpu_custom_call.1} parent=1 // pred_region
      %s374 = ssub.s32 1024, 1024
      %375 = vsyncadd [#allocation4], %s374
      %s376 = sshll.u32 [#allocation8], 4
      %s377 = int_to_ptr.vmem [resolvable:$true] %s376
      %382 = dma.vmem_to_hbm [thread:$0]  %s377, 1024, %s3, [#allocation4], 256, 256, 16
    $region29: #{tpu_custom_call.1} parent=1 // pred_fallthru
      _
    // Predicated region
    $region30: #{tpu_custom_call.1} parent=1 // pred_check
      _
    $region31: #{tpu_custom_call.1} parent=1 // pred_check_branch
      %384 = sbr.rel (0) target = $region33
    $region32: #{tpu_custom_call.1} parent=1 // pred_region
      %385 = dma.done [#allocation4], 1024
    $region33: #{tpu_custom_call.1} parent=1 // pred_fallthru
      _
    %386 = vsyncpa [#allocation3], 1
    %387 = vsyncpa [#allocation6], 1
    %388 = vsyncpa [#allocation4], 1

</llo_original>
